<compile_context>
chip_gen: v7x
topology: tpu7x:2x2x1
jax: 0.10.0
libtpu: 0.0.40
codegen_flags: <defaults>
</compile_context>

<pallas_src>
import jax
import jax.numpy as jnp
from jax.experimental import pallas as pl
from jax.experimental.pallas import tpu as pltpu

_LANE = 128                   # vreg lane width (last dim)
_SUBLANE = 8                  # vreg sublane count (second-to-last dim, f32)
_MIN_PALLAS_BYTES = 1 << 20   # below this a fused XLA broadcast add is faster


def _add_pos_kernel(x_ref, pos_ref, o_ref):
    # x_ref / o_ref: (tb, tf) block of the flattened input / output.
    # pos_ref:       (1, tf) block of the positional table, broadcast over rows.
    o_ref[...] = x_ref[...] + pos_ref[...]


def _choose_tiles(batch, flat, itemsize, target_block_bytes):
    """Pick (row_tile, col_tile) honouring the TPU (8, 128) block constraint."""
    budget_elems = max(_LANE, target_block_bytes // max(itemsize, 1))

    # Lane axis first: as wide as the budget allows for an 8-row slab.
    rows_hint = batch if batch <= _SUBLANE else _SUBLANE
    col_budget = max(_LANE, budget_elems // rows_hint)
    if flat <= col_budget:
        tf = flat                                 # full axis (always legal)
    else:
        tf = (col_budget // _LANE) * _LANE        # lane-dense multiple of 128

    # Sublane axis: soak up whatever budget remains.
    if batch <= _SUBLANE:
        tb = batch                                # full axis (always legal)
    else:
        rows = max(_SUBLANE, ((budget_elems // tf) // _SUBLANE) * _SUBLANE)
        tb = min(rows, pl.cdiv(batch, _SUBLANE) * _SUBLANE)
    return tb, tf


def positional_encoding_learnable(x, pos, *,
                                  target_block_bytes=2 * 1024 * 1024,
                                  force_pallas=False,
                                  donate_x=False):
    """out = x + pos.  x: (B, S, D);  pos: (1, S, D) or (S, D)."""
    B, S, D = x.shape
    pos = jnp.asarray(pos, dtype=x.dtype).reshape(1, S, D)

    # Tiny-problem fast path: launch + per-grid-step overhead (~0.35 us) plus
    # masked narrow stores make Pallas strictly slower than the fused XLA add.
    if not force_pallas and x.size * x.dtype.itemsize < _MIN_PALLAS_BYTES:
        return x + pos

    F = S * D
    x2 = x.reshape(B, F)
    pos2 = pos.reshape(1, F)

    itemsize = x.dtype.itemsize
    tb, tf = _choose_tiles(B, F, itemsize, target_block_bytes)

    # Feature tiles OUTER, batch tiles INNER (pos block reused across batch).
    grid = (pl.cdiv(F, tf), pl.cdiv(B, tb))

    # Explicit VMEM budget: double-buffered x + out blocks, double-buffered pos.
    x_block_bytes = tb * tf * itemsize
    pos_block_bytes = tf * itemsize
    vmem_need = 4 * x_block_bytes + 2 * pos_block_bytes
    vmem_limit = int(min(32 * 1024 * 1024,
                         max(2 * vmem_need, 16 * 1024 * 1024)))

    call = pl.pallas_call(
        _add_pos_kernel,
        out_shape=jax.ShapeDtypeStruct((B, F), x.dtype),
        grid_spec=pltpu.PrefetchScalarGridSpec(
            num_scalar_prefetch=0,
            grid=grid,
            in_specs=[
                pl.BlockSpec((tb, tf), lambda f, b: (b, f)),
                # Positional table: block index depends only on the OUTER grid
                # axis, so it is DMA'd once per feature tile and reused across
                # all inner batch steps.
                pl.BlockSpec((1, tf), lambda f, b: (0, f)),
            ],
            out_specs=pl.BlockSpec((tb, tf), lambda f, b: (b, f)),
        ),
        compiler_params=pltpu.CompilerParams(
            dimension_semantics=("parallel", "parallel"),
            vmem_limit_bytes=vmem_limit,
        ),
        input_output_aliases={0: 0} if donate_x else {},
    )

    return call(x2, pos2).reshape(B, S, D)


if __name__ == "__main__":
    key = jax.random.PRNGKey(0)
    kx, kp, kx2, kp2 = jax.random.split(key, 4)

    # Case 1: small transformer-style shapes (single lane-dense block).
    B, S, D = 2, 8, 32
    x = jax.random.normal(kx, (B, S, D), dtype=jnp.float32)
    pos = 0.02 * jax.random.normal(kp, (1, S, D), dtype=jnp.float32)
    out = positional_encoding_learnable(x, pos, force_pallas=True)
    out = jax.block_until_ready(out)
    assert out.shape == (B, S, D)
    assert jnp.allclose(out, x + pos, atol=1e-6, rtol=1e-6)

    # Case 2: odd shapes + tiny block budget -> multi-block grid, exercising
    # partial (masked) edge blocks on both axes and positional-table reuse
    # across the inner batch axis.
    B2, S2, D2 = 12, 20, 24   # F = 480, not a multiple of 128; B not mult. of 8
    x2 = jax.random.normal(kx2, (B2, S2, D2), dtype=jnp.float32)
    pos2 = 0.02 * jax.random.normal(kp2, (1, S2, D2), dtype=jnp.float32)
    out2 = positional_encoding_learnable(x2, pos2, force_pallas=True,
                                         target_block_bytes=4096)
    out2 = jax.block_until_ready(out2)
    assert out2.shape == (B2, S2, D2)
    assert jnp.allclose(out2, x2 + pos2, atol=1e-6, rtol=1e-6)

    print("KERNEL_OK")
</pallas_src>

<mosaic_0001>
module attributes {stable_mosaic.version = 11 : i64} {
  func.func @_add_pos_kernel(%arg0: i32, %arg1: i32, %arg2: memref<2x256xf32, #tpu.memory_space<vmem>>, %arg3: memref<1x256xf32, #tpu.memory_space<vmem>>, %arg4: memref<2x256xf32, #tpu.memory_space<vmem>>) attributes {dimension_semantics = [#tpu.dimension_semantics<parallel>, #tpu.dimension_semantics<parallel>], iteration_bounds = array<i64: 1, 1>, scalar_prefetch = 0 : i64, scratch_operands = 0 : i64, tpu.core_type = #tpu.core_type<tc>, window_params = [{transform_indices = @transform_0, window_bounds = array<i64: 2, 256>}, {transform_indices = @transform_1, window_bounds = array<i64: 1, 256>}, {transform_indices = @transform_2, window_bounds = array<i64: 2, 256>}]} {
    %c0 = arith.constant 0 : index
    %c0_0 = arith.constant 0 : index
    %0 = vector.load %arg2[%c0, %c0_0] : memref<2x256xf32, #tpu.memory_space<vmem>>, vector<2x256xf32>
    %c0_1 = arith.constant 0 : index
    %c0_2 = arith.constant 0 : index
    %1 = vector.load %arg3[%c0_1, %c0_2] : memref<1x256xf32, #tpu.memory_space<vmem>>, vector<1x256xf32>
    %2 = vector.broadcast %1 : vector<1x256xf32> to vector<2x256xf32>
    %3 = arith.addf %0, %2 : vector<2x256xf32>
    %c0_3 = arith.constant 0 : index
    %c0_4 = arith.constant 0 : index
    %4 = vector.load %arg4[%c0_3, %c0_4] : memref<2x256xf32, #tpu.memory_space<vmem>>, vector<2x256xf32>
    tpu.vector_store %arg4[%c0_3, %c0_4], %3 {strides = array<i32>} : memref<2x256xf32, #tpu.memory_space<vmem>>, vector<2x256xf32>,
    return
  }
  func.func @transform_0(%arg0: i32, %arg1: i32) -> (i32, i32) {
    %c0_i32 = arith.constant 0 : i32
    return %arg1, %arg0 : i32, i32
  }
  func.func @transform_1(%arg0: i32, %arg1: i32) -> (i32, i32) {
    %c0_i32 = arith.constant 0 : i32
    %c0_i32_0 = arith.constant 0 : i32
    return %c0_i32, %arg0 : i32, i32
  }
  func.func @transform_2(%arg0: i32, %arg1: i32) -> (i32, i32) {
    %c0_i32 = arith.constant 0 : i32
    return %arg1, %arg0 : i32, i32
  }
}

</mosaic_0001>

<llo_original>
// kernel: tpu_custom_call.1
$region0: #{tpu_custom_call.1}
  #allocation0 [shape = 'u32[]', space=smem, size = 0x4, offset = 0x4, fixed_abs, tag = 'smem constant byte address 0x4 - core index']
  #allocation1 [shape = 'u32[144,128]{1,0:T(1,128)}', space=vmem, size = 0x12000, scoped, tag = 'internal scratch']
  %s0 = inlined_call_operand.hbm [shape: f32[2,256], index: 0, kind: input, shape index: {}]
  %s1 = inlined_call_operand.vmem [shape: f32[1,256], index: 1, kind: input, shape index: {}]
  %s2 = inlined_call_operand.hbm [shape: f32[2,256], index: 2, kind: output, shape index: {}]
  %s3 = sld [smem:[#allocation0]]
  $region22: #{tpu_custom_call.1} parent=0
    _
  %s5 = ssub.s32 1, %s3
  %s6 = scalar_select 0, %s5, %s3
  $region1: #{tpu_custom_call.1} parent=0
    #allocation2 [shape = 'u8[2048]{0}', space=vmem, size = 0x800, scoped, tag = 'input window, operand 0, single buffered']
    #allocation3 [shape = 's32[1]{0}', space=sflag, size = 0x4, scoped, tag = 'scoped memory for tpu_custom_call.1']
    #allocation4 [shape = 's32[1]{0}', space=sflag, size = 0x4, scoped, tag = 'scoped memory for tpu_custom_call.1']
    #allocation5 [shape = 'u8[2048]{0}', space=vmem, size = 0x800, scoped, tag = 'output window, operand 0, single buffered']
    %7 = vsyncpa [#allocation3], 0
    %8 = vsyncpa [#allocation4], 0
    // Predicated region
    $region2: #{tpu_custom_call.1} parent=1 // pred_check
      _
    $region3: #{tpu_custom_call.1} parent=1 // pred_check_branch
      %10 = sbr.rel (0) target = $region5
    $region4: #{tpu_custom_call.1} parent=1 // pred_region
      %s12 = ssub.s32 64, 64
      %13 = vsyncadd [#allocation3], %s12
      %s15 = sshll.u32 [#allocation2], 4
      %s16 = int_to_ptr.vmem [resolvable:$true] %s15
      %18 = dma.hbm_to_vmem [thread:$0]  %s0, 64, %s16, [#allocation3]
    $region5: #{tpu_custom_call.1} parent=1 // pred_fallthru
      _
    // Predicated region
    $region6: #{tpu_custom_call.1} parent=1 // pred_check
      _
    $region7: #{tpu_custom_call.1} parent=1 // pred_check_branch
      %20 = sbr.rel (0) target = $region9
    $region8: #{tpu_custom_call.1} parent=1 // pred_region
      _
    $region9: #{tpu_custom_call.1} parent=1 // pred_fallthru
      _
    // Predicated region
    $region10: #{tpu_custom_call.1} parent=1 // pred_check
      _
    $region11: #{tpu_custom_call.1} parent=1 // pred_check_branch
      %22 = sbr.rel (0) target = $region13
    $region12: #{tpu_custom_call.1} parent=1 // pred_region
      %23 = dma.done [#allocation3], 64
    $region13: #{tpu_custom_call.1} parent=1 // pred_fallthru
      _
    %v24 = vld [vmem:[#allocation2] sm:$0xf]
    %v25 = vld [vmem:[%s1] sm:$0x3]
    %v27 = vlaneseq
    %v28 = vshrl.u32 %v27, 7
    %v29 = vsub.s32 0, %v28
    %v30 = vrot.slane %v25, %v29
    %v31 = vlaneseq
    %v32 = vshrl.u32 %v31, 7
    %v33 = vsub.s32 1, %v32
    %v34 = vrot.slane %v25, %v33
    %v35 = vcombine.low %v30, %v34
    %v37 = vunpack.c.l.s4 1983009808
    %v38 = vunpack.c.0.s8 %v37
    %v39 = vlaneseq
    %v40 = vshrl.u32 %v39, 7
    %v41 = vsub.s32 %v38, %v40
    %v42 = vrot.slane %v35, %v41
    %v44 = vadd.f32 %v24, %v42
    %45 = vst [vmem:[#allocation5] sm:$0xf] %v44
    // Predicated region
    $region14: #{tpu_custom_call.1} parent=1 // pred_check
      _
    $region15: #{tpu_custom_call.1} parent=1 // pred_check_branch
      %47 = sbr.rel (0) target = $region17
    $region16: #{tpu_custom_call.1} parent=1 // pred_region
      %s49 = ssub.s32 64, 64
      %50 = vsyncadd [#allocation4], %s49
      %s52 = sshll.u32 [#allocation5], 4
      %s53 = int_to_ptr.vmem [resolvable:$true] %s52
      %55 = dma.vmem_to_hbm [thread:$0]  %s53, 64, %s2, [#allocation4]
    $region17: #{tpu_custom_call.1} parent=1 // pred_fallthru
      _
    // Predicated region
    $region18: #{tpu_custom_call.1} parent=1 // pred_check
      _
    $region19: #{tpu_custom_call.1} parent=1 // pred_check_branch
      %57 = sbr.rel (0) target = $region21
    $region20: #{tpu_custom_call.1} parent=1 // pred_region
      %58 = dma.done [#allocation4], 64
    $region21: #{tpu_custom_call.1} parent=1 // pred_fallthru
      _
    %59 = vsyncpa [#allocation3], 1
    %60 = vsyncpa [#allocation4], 1

</llo_original>
